<compile_context>
chip_gen: v7x
topology: tpu7x:2x2x1
jax: 0.10.0
libtpu: 0.0.40
codegen_flags: <defaults>
</compile_context>

<pallas_src>
import functools
import math

import jax
import jax.numpy as jnp
from jax.experimental import pallas as pl
from jax.experimental.pallas import tpu as pltpu


def _fusion_kernel(x_ref, o_ref, *, scale, n):
    """x_ref: (N, C, T) tile of spatial locations; o_ref: (C, T) ego output."""
    x0 = x_ref[0].astype(jnp.float32)                        # (C, T) ego query

    # Pass 1: row-0 attention scores per agent, score_j[p] = <x0[:,p], xj[:,p]>*scale
    scores = []
    for j in range(n):                                       # N is tiny (2-5): unroll
        xj = x_ref[j].astype(jnp.float32)                    # (C, T)
        scores.append(jnp.sum(x0 * xj, axis=0, keepdims=True) * scale)  # (1, T)

    m = scores[0]
    for j in range(1, n):
        m = jnp.maximum(m, scores[j])                        # (1, T) running max

    # Pass 2: deferred-normalization softmax-weighted sum over agents.
    denom = jnp.zeros_like(m)                                # (1, T)
    acc = jnp.zeros_like(x0)                                 # (C, T)
    for j in range(n):
        e = jnp.exp(scores[j] - m)                           # (1, T)
        denom = denom + e
        acc = acc + e * x_ref[j].astype(jnp.float32)         # re-read slice: cheap

    inv = pl.reciprocal(denom, approx=True)                  # EUP slot (free here)
    o_ref[...] = (acc * inv).astype(o_ref.dtype)


def _choose_tile(s, n, c, in_itemsize, out_itemsize, vmem_tile_budget):
    """Largest 128-multiple spatial tile that fits the VMEM tile budget."""
    bytes_per_col = (
        2 * n * c * in_itemsize      # double-buffered input block
        + 2 * c * out_itemsize       # double-buffered output block
        + 3 * c * 4                  # x0 / xj / acc f32 live values
        + 4 * n * 4                  # per-agent score rows (f32)
    )
    tile = vmem_tile_budget // max(bytes_per_col, 1)
    tile = max(128, min(2048, (tile // 128) * 128))
    # Keep >= 2 grid steps when possible so v7x's 2 TensorCores both get work.
    if s > 128 and pl.cdiv(s, tile) < 2:
        tile = max(128, pl.cdiv(pl.cdiv(s, 2), 128) * 128)
    return int(tile)


def attention_fusion(x, *, tile_s=None, vmem_tile_budget=24 << 20):
    """x: (cav_num, C, H, W)  ->  (C, H, W)   (ego's fused feature)."""
    n, c, h, w = x.shape
    s = h * w
    itemsize = jnp.dtype(x.dtype).itemsize
    if tile_s is None:
        tile_s = _choose_tile(s, n, c, itemsize, itemsize, vmem_tile_budget)

    xf = x.reshape(n, c, s)
    scale = 1.0 / math.sqrt(float(c))
    grid_n = pl.cdiv(s, tile_s)                              # masked tail handled by Pallas

    cost = pl.CostEstimate(
        flops=4 * n * c * s,                                 # dot + weighted sum
        transcendentals=(n + 1) * s,                         # exp + reciprocal
        bytes_accessed=n * c * s * itemsize + c * s * itemsize,
    )

    out = pl.pallas_call(
        functools.partial(_fusion_kernel, scale=scale, n=n),
        out_shape=jax.ShapeDtypeStruct((c, s), x.dtype),
        grid=(grid_n,),
        in_specs=[pl.BlockSpec((n, c, tile_s), lambda i: (0, 0, i))],
        out_specs=pl.BlockSpec((c, tile_s), lambda i: (0, i)),
        compiler_params=pltpu.CompilerParams(
            dimension_semantics=("parallel",),
            vmem_limit_bytes=48 << 20,                       # v5e default (16 MiB) too small
        ),
        cost_estimate=cost,
    )(xf)
    return out.reshape(c, h, w)


def attention_fusion_ref(x):
    """Pure-JAX reference reproducing the PyTorch module exactly."""
    n, c, h, w = x.shape
    xp = x.reshape(n, c, h * w).transpose(2, 0, 1)            # (S, N, C)
    score = jnp.einsum("snc,smc->snm", xp, xp) / (float(c) ** 0.5)
    attn = jax.nn.softmax(score, axis=-1)
    ctx = jnp.einsum("snm,smc->snc", attn, xp)                # (S, N, C)
    return ctx.transpose(1, 2, 0).reshape(n, c, h, w)[0]


if __name__ == "__main__":
    key = jax.random.PRNGKey(0)
    cav_num, C, H, W = 2, 4, 16, 16
    x = jax.random.normal(key, (cav_num, C, H, W), dtype=jnp.float32)

    out = attention_fusion(x)
    out = jax.block_until_ready(out)

    ref = attention_fusion_ref(x)
    assert out.shape == (C, H, W)
    # approx=True reciprocal (EUP) is not bit-exact -> slightly loosened tolerance.
    assert jnp.allclose(out, ref, atol=3e-3, rtol=3e-3), (
        float(jnp.max(jnp.abs(out - ref)))
    )
    print("KERNEL_OK")
</pallas_src>

<mosaic_0001>
module attributes {stable_mosaic.version = 11 : i64} {
  func.func @_fusion_kernel(%arg0: i32, %arg1: memref<2x4x128xf32, #tpu.memory_space<vmem>>, %arg2: memref<4x128xf32, #tpu.memory_space<vmem>>) attributes {dimension_semantics = [#tpu.dimension_semantics<parallel>], iteration_bounds = array<i64: 2>, scalar_prefetch = 0 : i64, scratch_operands = 0 : i64, tpu.core_type = #tpu.core_type<tc>, window_params = [{transform_indices = @transform_0, window_bounds = array<i64: 2, 4, 128>}, {transform_indices = @transform_1, window_bounds = array<i64: 4, 128>}]} {
    %c0 = arith.constant 0 : index
    %c0_0 = arith.constant 0 : index
    %c0_1 = arith.constant 0 : index
    %0 = vector.load %arg1[%c0, %c0_0, %c0_1] : memref<2x4x128xf32, #tpu.memory_space<vmem>>, vector<1x4x128xf32>
    %1 = vector.shape_cast %0 : vector<1x4x128xf32> to vector<4x128xf32>
    %c0_2 = arith.constant 0 : index
    %c0_3 = arith.constant 0 : index
    %c0_4 = arith.constant 0 : index
    %2 = vector.load %arg1[%c0_2, %c0_3, %c0_4] : memref<2x4x128xf32, #tpu.memory_space<vmem>>, vector<1x4x128xf32>
    %3 = vector.shape_cast %2 : vector<1x4x128xf32> to vector<4x128xf32>
    %4 = arith.mulf %1, %3 : vector<4x128xf32>
    %cst = arith.constant dense<0.000000e+00> : vector<128xf32>
    %5 = vector.multi_reduction <add>, %4, %cst [0] : vector<4x128xf32> to vector<128xf32>
    %6 = vector.shape_cast %5 : vector<128xf32> to vector<1x128xf32>
    %cst_5 = arith.constant 5.000000e-01 : f32
    %7 = vector.broadcast %cst_5 : f32 to vector<1x128xf32>
    %8 = arith.mulf %6, %7 : vector<1x128xf32>
    %c1 = arith.constant 1 : index
    %c0_6 = arith.constant 0 : index
    %c0_7 = arith.constant 0 : index
    %9 = vector.load %arg1[%c1, %c0_6, %c0_7] : memref<2x4x128xf32, #tpu.memory_space<vmem>>, vector<1x4x128xf32>
    %10 = vector.shape_cast %9 : vector<1x4x128xf32> to vector<4x128xf32>
    %11 = arith.mulf %1, %10 : vector<4x128xf32>
    %cst_8 = arith.constant dense<0.000000e+00> : vector<128xf32>
    %12 = vector.multi_reduction <add>, %11, %cst_8 [0] : vector<4x128xf32> to vector<128xf32>
    %13 = vector.shape_cast %12 : vector<128xf32> to vector<1x128xf32>
    %cst_9 = arith.constant 5.000000e-01 : f32
    %14 = vector.broadcast %cst_9 : f32 to vector<1x128xf32>
    %15 = arith.mulf %13, %14 : vector<1x128xf32>
    %16 = arith.maximumf %8, %15 : vector<1x128xf32>
    %cst_10 = arith.constant 0.000000e+00 : f32
    %17 = vector.broadcast %cst_10 : f32 to vector<1x128xf32>
    %cst_11 = arith.constant 0.000000e+00 : f32
    %18 = vector.broadcast %cst_11 : f32 to vector<4x128xf32>
    %19 = arith.subf %8, %16 : vector<1x128xf32>
    %20 = math.exp %19 : vector<1x128xf32>
    %21 = arith.addf %17, %20 : vector<1x128xf32>
    %c0_12 = arith.constant 0 : index
    %c0_13 = arith.constant 0 : index
    %c0_14 = arith.constant 0 : index
    %22 = vector.load %arg1[%c0_12, %c0_13, %c0_14] : memref<2x4x128xf32, #tpu.memory_space<vmem>>, vector<1x4x128xf32>
    %23 = vector.shape_cast %22 : vector<1x4x128xf32> to vector<4x128xf32>
    %24 = vector.broadcast %20 : vector<1x128xf32> to vector<4x128xf32>
    %25 = arith.mulf %24, %23 : vector<4x128xf32>
    %26 = arith.addf %18, %25 : vector<4x128xf32>
    %27 = arith.subf %15, %16 : vector<1x128xf32>
    %28 = math.exp %27 : vector<1x128xf32>
    %29 = arith.addf %21, %28 : vector<1x128xf32>
    %c1_15 = arith.constant 1 : index
    %c0_16 = arith.constant 0 : index
    %c0_17 = arith.constant 0 : index
    %30 = vector.load %arg1[%c1_15, %c0_16, %c0_17] : memref<2x4x128xf32, #tpu.memory_space<vmem>>, vector<1x4x128xf32>
    %31 = vector.shape_cast %30 : vector<1x4x128xf32> to vector<4x128xf32>
    %32 = vector.broadcast %28 : vector<1x128xf32> to vector<4x128xf32>
    %33 = arith.mulf %32, %31 : vector<4x128xf32>
    %34 = arith.addf %26, %33 : vector<4x128xf32>
    %35 = tpu.reciprocal %29 {approx = true} : vector<1x128xf32> -> vector<1x128xf32>
    %36 = vector.broadcast %35 : vector<1x128xf32> to vector<4x128xf32>
    %37 = arith.mulf %34, %36 : vector<4x128xf32>
    %c0_18 = arith.constant 0 : index
    %c0_19 = arith.constant 0 : index
    %38 = vector.load %arg2[%c0_18, %c0_19] : memref<4x128xf32, #tpu.memory_space<vmem>>, vector<4x128xf32>
    tpu.vector_store %arg2[%c0_18, %c0_19], %37 {strides = array<i32>} : memref<4x128xf32, #tpu.memory_space<vmem>>, vector<4x128xf32>,
    return
  }
  func.func @transform_0(%arg0: i32) -> (i32, i32, i32) {
    %c0_i32 = arith.constant 0 : i32
    %c0_i32_0 = arith.constant 0 : i32
    %c0_i32_1 = arith.constant 0 : i32
    return %c0_i32, %c0_i32_0, %arg0 : i32, i32, i32
  }
  func.func @transform_1(%arg0: i32) -> (i32, i32) {
    %c0_i32 = arith.constant 0 : i32
    %c0_i32_0 = arith.constant 0 : i32
    return %c0_i32, %arg0 : i32, i32
  }
}

</mosaic_0001>

<llo_original>
// kernel: tpu_custom_call.1
$region0: #{tpu_custom_call.1}
  #allocation0 [shape = 'u32[]', space=smem, size = 0x4, offset = 0x4, fixed_abs, tag = 'smem constant byte address 0x4 - core index']
  #allocation1 [shape = 'u32[144,128]{1,0:T(1,128)}', space=vmem, size = 0x12000, scoped, tag = 'internal scratch']
  %s0 = inlined_call_operand.hbm [shape: f32[2,4,256], index: 0, kind: input, shape index: {}]
  %s1 = inlined_call_operand.hbm [shape: f32[4,256], index: 1, kind: output, shape index: {}]
  %s2 = sld [smem:[#allocation0]]
  $region41: #{tpu_custom_call.1} parent=0
    _
  %s4 = ssub.s32 1, %s2
  %s5 = scalar_select 0, %s4, %s2
  $region1: #{tpu_custom_call.1} parent=0
    #allocation2 [shape = 'u8[8192]{0}', space=vmem, size = 0x2000, scoped, tag = 'input window, operand 0']
    #allocation3 [shape = 's32[2]{0}', space=sflag, size = 0x8, scoped, tag = 'scoped memory for tpu_custom_call.1']
    #allocation4 [shape = 's32[2]{0}', space=sflag, size = 0x8, scoped, tag = 'scoped memory for tpu_custom_call.1']
    #allocation5 [shape = 'u8[4096]{0}', space=vmem, size = 0x1000, scoped, tag = 'output window, operand 0']
    %6 = vsyncpa [#allocation3], 0
    %s7 = scalar_lea.sflag [#allocation3], 1
    %8 = vsyncpa %s7, 0
    %9 = vsyncpa [#allocation4], 0
    %s10 = scalar_lea.sflag [#allocation4], 1
    %11 = vsyncpa %s10, 0
    loop: start=0, step=1, limit=4
    $region2: #{tpu_custom_call.1} parent=1 // loop_pre_header
      _
    $region3: #{tpu_custom_call.1} parent=1 // loop_header
      %s13 = sphi 0, %s17
      %p14 = scmp.ge.s32.totalorder %s13, 4
      %s23 = sphi 0, %s25
      %s26 = sphi 0, %s23
      %s27 = sphi 0, %s26
      %s43 = sphi 0, %s27
      %s49 = sphi 0, %s51
      %s52 = sphi 0, %s49
      %s53 = sphi 0, %s52
      %s69 = sphi 0, %s53
    $region4: #{tpu_custom_call.1} parent=1 // loop_header_branch
      %16 = sbr.rel (%p14) target = $region8
    $region5: #{tpu_custom_call.1} parent=1 // loop_body
      %s18 = ssub.s32 %s13, 1
      %s19 = ssub.s32 %s13, 2
      %s20 = sadd.s32 %s13, 1
      %s21 = ssub.s32 %s13, %s20
      %p22 = scmp.eq.s32.totalorder %s21, 0
      %s24 = sadd.s32 %s23, 1
      %s25 = scalar_select %p22, %s23, %s24
      %p28 = pneg %p22
      %p29 = scmp.eq.s32.totalorder %s13, 1
      %p30 = por %p28, %p29
      %p31 = scmp.ne.s32.totalorder %s23, %s26
      %p32 = scmp.eq.s32.totalorder %s13, 0
      %p33 = por %p31, %p32
      %p34 = scmp.ne.s32.totalorder %s23, %s26
      %p35 = scmp.eq.s32.totalorder %s18, 1
      %p36 = por %p34, %p35
      %p37 = scmp.ne.s32.totalorder %s26, %s27
      %p38 = scmp.eq.s32.totalorder %s18, 0
      %p39 = por %p37, %p38
      %p40 = scmp.ne.s32.totalorder %s26, %s27
      %p41 = scmp.eq.s32.totalorder %s19, 1
      %p42 = por %p40, %p41
      %p44 = scmp.ne.s32.totalorder %s27, %s43
      %p45 = scmp.eq.s32.totalorder %s19, 0
      %p46 = por %p44, %p45
      %s47 = ssub.s32 %s13, %s20
      %p48 = scmp.eq.s32.totalorder %s47, 0
      %s50 = sadd.s32 %s49, 1
      %s51 = scalar_select %p48, %s49, %s50
      %p54 = pneg %p48
      %p55 = scmp.eq.s32.totalorder %s13, 1
      %p56 = por %p54, %p55
      %p57 = scmp.ne.s32.totalorder %s49, %s52
      %p58 = scmp.eq.s32.totalorder %s13, 0
      %p59 = por %p57, %p58
      %p60 = scmp.ne.s32.totalorder %s49, %s52
      %p61 = scmp.eq.s32.totalorder %s18, 1
      %p62 = por %p60, %p61
      %p63 = scmp.ne.s32.totalorder %s52, %s53
      %p64 = scmp.eq.s32.totalorder %s18, 0
      %p65 = por %p63, %p64
      %p66 = scmp.ne.s32.totalorder %s52, %s53
      %p67 = scmp.eq.s32.totalorder %s19, 1
      %p68 = por %p66, %p67
      %p70 = scmp.ne.s32.totalorder %s53, %s69
      %p71 = scmp.eq.s32.totalorder %s19, 0
      %p72 = por %p70, %p71
      %p73 = scmp.le.s32.totalorder 1, %s13
      %p74 = scmp.lt.s32.totalorder %s13, 3
      %p75 = pnand %p73, %p74
      %p76 = pneg %p75
      // Predicated region
      $region9: #{tpu_custom_call.1} parent=5 // pred_check
        _
      $region10: #{tpu_custom_call.1} parent=5 // pred_check_branch
        %78 = sbr.rel (%p75) target = $region12
      $region11: #{tpu_custom_call.1} parent=5 // pred_region
        %s79 = ssub.s32 %s13, 1
      $region12: #{tpu_custom_call.1} parent=5 // pred_fallthru
        _
      %p80 = scmp.lt.s32.totalorder %s13, 2
      // Predicated region
      $region13: #{tpu_custom_call.1} parent=5 // pred_check
        %p81 = pneg %p80
      $region14: #{tpu_custom_call.1} parent=5 // pred_check_branch
        %83 = sbr.rel (%p81) target = $region16
      $region15: #{tpu_custom_call.1} parent=5 // pred_region
        // Predicated region
        $region17: #{tpu_custom_call.1} parent=15 // pred_check
          %p84 = pneg %p33
        $region18: #{tpu_custom_call.1} parent=15 // pred_check_branch
          %86 = sbr.rel (%p84) target = $region20
        $region19: #{tpu_custom_call.1} parent=15 // pred_region
          %s87 = sand.u32 %s23, 1
          %s88 = scalar_lea.sflag [#allocation3], %s87
          %s89 = sand.u32 %s23, 1
          %s90 = smul.addr %s89, 8
          %s91 = scalar_lea.vmem [#allocation2], %s90
          %s93 = ssub.s32 128, 128
          %94 = vsyncadd %s88, %s93
          %s95 = smul.addr %s13, 64
          %s96 = scalar_lea.hbm %s0, %s95
          %s97 = sshll.u32 %s91, 4
          %s98 = int_to_ptr.vmem [resolvable:$true] %s97
          %103 = dma.hbm_to_vmem [thread:$0]  %s96, 128, %s98, %s88, 128, 64, 4
        $region20: #{tpu_custom_call.1} parent=15 // pred_fallthru
          _
      $region16: #{tpu_custom_call.1} parent=5 // pred_fallthru
        _
      %p104 = scmp.le.s32.totalorder 1, %s13
      %p105 = scmp.lt.s32.totalorder %s13, 3
      %p106 = pnand %p104, %p105
      %p107 = pneg %p106
      // Predicated region
      $region21: #{tpu_custom_call.1} parent=5 // pred_check
        _
      $region22: #{tpu_custom_call.1} parent=5 // pred_check_branch
        %109 = sbr.rel (%p106) target = $region24
      $region23: #{tpu_custom_call.1} parent=5 // pred_region
        %s110 = ssub.s32 %s13, 1
        %s111 = sand.u32 %s26, 1
        %s112 = scalar_lea.sflag [#allocation3], %s111
        %s113 = sand.u32 %s26, 1
        %s114 = smul.addr %s113, 8
        %s115 = scalar_lea.vmem [#allocation2], %s114
        // Predicated region
        $region25: #{tpu_custom_call.1} parent=23 // pred_check
          %p116 = pneg %p39
        $region26: #{tpu_custom_call.1} parent=23 // pred_check_branch
          %118 = sbr.rel (%p116) target = $region28
        $region27: #{tpu_custom_call.1} parent=23 // pred_region
          %119 = dma.done %s112, 128
        $region28: #{tpu_custom_call.1} parent=23 // pred_fallthru
          _
        %s120 = sand.u32 %s26, 1
        %s121 = scalar_lea.sflag [#allocation3], %s120
        %s122 = sand.u32 %s26, 1
        %s123 = smul.addr %s122, 8
        %s124 = scalar_lea.vmem [#allocation2], %s123
        %p125 = pneg %p39
        %p126 = pneg %p36
        %p127 = pneg %p65
        %p128 = pneg %p62
        %s129 = sand.u32 %s52, 1
        %s130 = scalar_lea.sflag [#allocation4], %s129
        %s131 = sand.u32 %s52, 1
        %s132 = smul.addr %s131, 4
        %s133 = scalar_lea.vmem [#allocation5], %s132
        %v134 = vld [vmem:[%s115] sm:$0xf]
        %v135 = vmul.f32 %v134, %v134
        %vm136 = vcmask 1043456
        %v137 = vsel %vm136, %v135, 0.0
        %v138 = vrot.slane %v137, 4
        %v139 = vadd.f32 %v137, %v138
        %v140 = vrot.slane %v139, 2
        %v141 = vadd.f32 %v139, %v140
        %v142 = vrot.slane %v141, 1
        %v143 = vadd.f32 %v141, %v142
        %v144 = vmul.f32 %v143, 0.5
        %s145 = scalar_lea.vmem %s115, 4 [#allocation2]
        %v146 = vld [vmem:[%s145] sm:$0xf]
        %v147 = vmul.f32 %v134, %v146
        %v148 = vsel %vm136, %v147, 0.0
        %v149 = vrot.slane %v148, 4
        %v150 = vadd.f32 %v148, %v149
        %v151 = vrot.slane %v150, 2
        %v152 = vadd.f32 %v150, %v151
        %v153 = vrot.slane %v152, 1
        %v154 = vadd.f32 %v152, %v153
        %v155 = vmul.f32 %v154, 0.5
        %v156 = vmax.f32 %v144, %v155
        %v157 = vsub.f32 %v144, %v156
        %v158 = vmul.f32 %v157, 1.442695
        %v159 = vpow.pop %v158
        %v160 = vadd.f32 %v159, 0.0
        %v161 = vmul.f32 %v159, %v134
        %v162 = vadd.f32 %v161, 0.0
        %v163 = vsub.f32 %v155, %v156
        %v164 = vmul.f32 %v163, 1.442695
        %v165 = vpow.pop %v164
        %v166 = vadd.f32 %v160, %v165
        %v167 = vmul.f32 %v165, %v146
        %v168 = vadd.f32 %v162, %v167
        %v169 = vrcp.pop %v166
        %v170 = vmul.f32 %v168, %v169
        %171 = vst [vmem:[%s133] sm:$0xf] %v170
        %s172 = sand.u32 %s52, 1
        %s173 = scalar_lea.sflag [#allocation4], %s172
        %s174 = sand.u32 %s52, 1
        %s175 = smul.addr %s174, 4
        %s176 = scalar_lea.vmem [#allocation5], %s175
        // Predicated region
        $region29: #{tpu_custom_call.1} parent=23 // pred_check
          %p177 = pneg %p62
        $region30: #{tpu_custom_call.1} parent=23 // pred_check_branch
          %179 = sbr.rel (%p177) target = $region32
        $region31: #{tpu_custom_call.1} parent=23 // pred_region
          %s181 = ssub.s32 64, 64
          %182 = vsyncadd %s173, %s181
          %s183 = smul.addr %s18, 64
          %s184 = scalar_lea.hbm %s1, %s183
          %s186 = sshll.u32 %s176, 4
          %s187 = int_to_ptr.vmem [resolvable:$true] %s186
          %189 = dma.vmem_to_hbm [thread:$0]  %s187, 64, %s184, %s173
        $region32: #{tpu_custom_call.1} parent=23 // pred_fallthru
          _
      $region24: #{tpu_custom_call.1} parent=5 // pred_fallthru
        _
      %p190 = scmp.le.s32.totalorder 2, %s13
      // Predicated region
      $region33: #{tpu_custom_call.1} parent=5 // pred_check
        %p191 = pneg %p190
      $region34: #{tpu_custom_call.1} parent=5 // pred_check_branch
        %193 = sbr.rel (%p191) target = $region36
      $region35: #{tpu_custom_call.1} parent=5 // pred_region
        %s194 = ssub.s32 %s13, 2
        // Predicated region
        $region37: #{tpu_custom_call.1} parent=35 // pred_check
          %p195 = pneg %p68
        $region38: #{tpu_custom_call.1} parent=35 // pred_check_branch
          %197 = sbr.rel (%p195) target = $region40
        $region39: #{tpu_custom_call.1} parent=35 // pred_region
          %s198 = sand.u32 %s53, 1
          %s199 = scalar_lea.sflag [#allocation4], %s198
          %s200 = sand.u32 %s53, 1
          %s201 = smul.addr %s200, 4
          %s202 = scalar_lea.vmem [#allocation5], %s201
          %203 = dma.done %s199, 64
        $region40: #{tpu_custom_call.1} parent=35 // pred_fallthru
          _
      $region36: #{tpu_custom_call.1} parent=5 // pred_fallthru
        _
    $region6: #{tpu_custom_call.1} parent=1 // loop_footer
      %s17 = sadd.s32 1, %s13
    $region7: #{tpu_custom_call.1} parent=1 // loop_footer_branch
      %12 = sbr.rel target = $region3
    $region8: #{tpu_custom_call.1} parent=1 // loop_exit
      _
    %204 = vsyncpa [#allocation3], 1
    %s205 = scalar_lea.sflag [#allocation3], 1
    %206 = vsyncpa %s205, 1
    %207 = vsyncpa [#allocation4], 1
    %s208 = scalar_lea.sflag [#allocation4], 1
    %209 = vsyncpa %s208, 1

</llo_original>
